<compile_context>
chip_gen: v7x
topology: tpu7x:2x2x1
jax: 0.10.0
libtpu: 0.0.40
codegen_flags: <defaults>
</compile_context>

<pallas_src>
import functools
import math

import jax
import jax.numpy as jnp
from jax.experimental import pallas as pl
from jax.experimental.pallas import tpu as pltpu

_ONE_HOT_EPS = 1e-6  # kornia one_hot() default eps (independent of module eps)


# ----------------------------------------------------------------------------
# Pallas kernel: fused softmax + one-hot + focal weighting + class reduction
# ----------------------------------------------------------------------------
def _focal_loss_kernel(x_ref, t_ref, o_ref, *, alpha, gamma, eps):
    x = x_ref[...].astype(jnp.float32)          # (N, C, TP)  logits tile
    t = t_ref[...]                              # (N, TP)     int32 labels

    # numerically-stable softmax over the class axis (axis=1, sublanes)
    m = jnp.max(x, axis=1, keepdims=True)
    e = jnp.exp(x - m)
    s = jnp.sum(e, axis=1, keepdims=True)
    p = e / s + eps                             # input_soft = softmax + eps
    logp = jnp.log(p)

    one_m_p = 1.0 - p
    if gamma == 2.0:                            # avoid pow for the common case
        w = one_m_p * one_m_p
    else:
        w = jnp.power(jnp.maximum(one_m_p, 0.0), gamma)

    focal = (-alpha) * w * logp                 # (N, C, TP)

    # one_hot(target) + eps, built in-register (no scatter)
    cls = jax.lax.broadcasted_iota(jnp.int32, focal.shape, dimension=1)
    onehot = jnp.where(cls == t[:, None, :], 1.0, 0.0) + _ONE_HOT_EPS

    o_ref[...] = jnp.sum(onehot * focal, axis=1).astype(o_ref.dtype)


# ----------------------------------------------------------------------------
# Wrapper
# ----------------------------------------------------------------------------
def focal_loss_pallas(logits, target, *, alpha, gamma=2.0, reduction="none",
                      eps=1e-6):
    """logits: (N, C, *spatial) float; target: (N, *spatial) int. Matches
    kornia.losses.focal_loss / FocalLoss.forward (inference semantics)."""
    N, C = int(logits.shape[0]), int(logits.shape[1])
    spatial = tuple(int(d) for d in logits.shape[2:])
    P = int(math.prod(spatial)) if spatial else 1

    x = logits.reshape(N, C, P).astype(jnp.float32)
    t = target.reshape(N, P).astype(jnp.int32)

    # pad the pixel axis to a multiple of 128 -> lane-dense blocks / stores
    P_pad = max(128, ((P + 127) // 128) * 128)
    if P_pad != P:
        x = jnp.pad(x, ((0, 0), (0, 0), (0, P_pad - P)))
        t = jnp.pad(t, ((0, 0), (0, P_pad - P)))

    # largest lane-dense pixel tile that divides P_pad (whole thing if small)
    TP = 128
    for cand in (4096, 2048, 1024, 512, 256, 128):
        if P_pad % cand == 0:
            TP = cand
            break
    grid = (P_pad // TP,)

    kernel = functools.partial(_focal_loss_kernel, alpha=float(alpha),
                               gamma=float(gamma), eps=float(eps))

    elems = N * C * P_pad
    cost = pl.CostEstimate(
        flops=10 * elems,
        transcendentals=2 * elems,                       # exp + log per element
        bytes_accessed=4 * (elems + 2 * N * P_pad),      # x + target + output
    )

    out = pl.pallas_call(
        kernel,
        out_shape=jax.ShapeDtypeStruct((N, P_pad), jnp.float32),
        grid=grid,
        in_specs=[
            pl.BlockSpec((N, C, TP), lambda j: (0, 0, j)),
            pl.BlockSpec((N, TP), lambda j: (0, j)),
        ],
        out_specs=pl.BlockSpec((N, TP), lambda j: (0, j)),
        compiler_params=pltpu.CompilerParams(dimension_semantics=("parallel",)),
        cost_estimate=cost,
    )(x, t)

    loss = out[:, :P].reshape((N,) + spatial)
    if reduction == "none":
        return loss
    if reduction == "mean":
        return jnp.mean(loss)
    if reduction == "sum":
        return jnp.sum(loss)
    raise NotImplementedError(f"Invalid reduction mode: {reduction}")


# ----------------------------------------------------------------------------
# Pure-JAX reference (mirrors the PyTorch math exactly)
# ----------------------------------------------------------------------------
def focal_loss_ref(logits, target, *, alpha, gamma=2.0, reduction="none",
                   eps=1e-6):
    p = jax.nn.softmax(logits.astype(jnp.float32), axis=1) + eps
    onehot = jax.nn.one_hot(target, logits.shape[1], axis=1,
                            dtype=jnp.float32) + _ONE_HOT_EPS
    one_m_p = 1.0 - p
    w = one_m_p * one_m_p if gamma == 2.0 else jnp.power(
        jnp.maximum(one_m_p, 0.0), gamma)
    focal = -alpha * w * jnp.log(p)
    loss = jnp.sum(onehot * focal, axis=1)
    if reduction == "none":
        return loss
    if reduction == "mean":
        return jnp.mean(loss)
    if reduction == "sum":
        return jnp.sum(loss)
    raise NotImplementedError(reduction)


# ----------------------------------------------------------------------------
if __name__ == "__main__":
    key = jax.random.PRNGKey(0)
    kx, kt = jax.random.split(key)

    # FocalLoss expects (N, C, *) logits and (N, *) integer targets.
    N, C, H, W = 2, 4, 16, 16
    logits = jax.random.normal(kx, (N, C, H, W), jnp.float32)
    target = jax.random.randint(kt, (N, H, W), 0, C, jnp.int32)

    alpha, gamma = 0.5, 2.0

    # reduction='none' (module default)
    out = jax.block_until_ready(
        focal_loss_pallas(logits, target, alpha=alpha, gamma=gamma,
                          reduction="none"))
    assert out.shape == (N, H, W), out.shape
    ref = jax.block_until_ready(
        focal_loss_ref(logits, target, alpha=alpha, gamma=gamma,
                       reduction="none"))
    assert jnp.allclose(out, ref, atol=1e-5, rtol=1e-5), \
        float(jnp.max(jnp.abs(out - ref)))

    # reduction='mean' (docstring example)
    out_m = jax.block_until_ready(
        focal_loss_pallas(logits, target, alpha=alpha, gamma=gamma,
                          reduction="mean"))
    ref_m = focal_loss_ref(logits, target, alpha=alpha, gamma=gamma,
                           reduction="mean")
    assert jnp.allclose(out_m, ref_m, atol=1e-5, rtol=1e-5), \
        float(jnp.abs(out_m - ref_m))

    print("KERNEL_OK")
</pallas_src>

<mosaic_0001>
module attributes {stable_mosaic.version = 11 : i64} {
  func.func @_focal_loss_kernel(%arg0: i32, %arg1: memref<2x4x256xf32, #tpu.memory_space<vmem>>, %arg2: memref<2x256xi32, #tpu.memory_space<vmem>>, %arg3: memref<2x256xf32, #tpu.memory_space<vmem>>) attributes {dimension_semantics = [#tpu.dimension_semantics<parallel>], iteration_bounds = array<i64: 1>, scalar_prefetch = 0 : i64, scratch_operands = 0 : i64, tpu.core_type = #tpu.core_type<tc>, window_params = [{transform_indices = @transform_0, window_bounds = array<i64: 2, 4, 256>}, {transform_indices = @transform_1, window_bounds = array<i64: 2, 256>}, {transform_indices = @transform_2, window_bounds = array<i64: 2, 256>}]} {
    %c0 = arith.constant 0 : index
    %c0_0 = arith.constant 0 : index
    %c0_1 = arith.constant 0 : index
    %0 = vector.load %arg1[%c0, %c0_0, %c0_1] : memref<2x4x256xf32, #tpu.memory_space<vmem>>, vector<2x4x256xf32>
    %c0_2 = arith.constant 0 : index
    %c0_3 = arith.constant 0 : index
    %1 = vector.load %arg2[%c0_2, %c0_3] : memref<2x256xi32, #tpu.memory_space<vmem>>, vector<2x256xi32>
    %cst = arith.constant dense<0xFF800000> : vector<2x256xf32>
    %2 = vector.multi_reduction <maximumf>, %0, %cst [1] : vector<2x4x256xf32> to vector<2x256xf32>
    %3 = vector.shape_cast %2 : vector<2x256xf32> to vector<2x1x256xf32>
    %4 = vector.broadcast %3 : vector<2x1x256xf32> to vector<2x4x256xf32>
    %5 = arith.subf %0, %4 : vector<2x4x256xf32>
    %6 = math.exp %5 : vector<2x4x256xf32>
    %cst_4 = arith.constant dense<0.000000e+00> : vector<2x256xf32>
    %7 = vector.multi_reduction <add>, %6, %cst_4 [1] : vector<2x4x256xf32> to vector<2x256xf32>
    %8 = vector.shape_cast %7 : vector<2x256xf32> to vector<2x1x256xf32>
    %9 = vector.broadcast %8 : vector<2x1x256xf32> to vector<2x4x256xf32>
    %10 = arith.divf %6, %9 : vector<2x4x256xf32>
    %cst_5 = arith.constant 9.99999997E-7 : f32
    %11 = vector.broadcast %cst_5 : f32 to vector<2x4x256xf32>
    %12 = arith.addf %10, %11 : vector<2x4x256xf32>
    %13 = math.log %12 : vector<2x4x256xf32>
    %cst_6 = arith.constant 1.000000e+00 : f32
    %14 = vector.broadcast %cst_6 : f32 to vector<2x4x256xf32>
    %15 = arith.subf %14, %12 : vector<2x4x256xf32>
    %16 = arith.mulf %15, %15 : vector<2x4x256xf32>
    %cst_7 = arith.constant -5.000000e-01 : f32
    %17 = vector.broadcast %cst_7 : f32 to vector<2x4x256xf32>
    %18 = arith.mulf %17, %16 : vector<2x4x256xf32>
    %19 = arith.mulf %18, %13 : vector<2x4x256xf32>
    %20 = tpu.iota {dimensions = array<i32: 1>} : vector<2x4x256xi32>
    %21 = vector.shape_cast %1 : vector<2x256xi32> to vector<2x1x256xi32>
    %22 = vector.broadcast %21 : vector<2x1x256xi32> to vector<2x4x256xi32>
    %23 = arith.cmpi eq, %20, %22 : vector<2x4x256xi32>
    %cst_8 = arith.constant 1.000000e+00 : f32
    %cst_9 = arith.constant 0.000000e+00 : f32
    %24 = vector.broadcast %cst_8 : f32 to vector<2x4x256xf32>
    %25 = vector.broadcast %cst_9 : f32 to vector<2x4x256xf32>
    %26 = arith.select %23, %24, %25 : vector<2x4x256xi1>, vector<2x4x256xf32>
    %cst_10 = arith.constant 9.99999997E-7 : f32
    %27 = vector.broadcast %cst_10 : f32 to vector<2x4x256xf32>
    %28 = arith.addf %26, %27 : vector<2x4x256xf32>
    %29 = arith.mulf %28, %19 : vector<2x4x256xf32>
    %cst_11 = arith.constant dense<0.000000e+00> : vector<2x256xf32>
    %30 = vector.multi_reduction <add>, %29, %cst_11 [1] : vector<2x4x256xf32> to vector<2x256xf32>
    %c0_12 = arith.constant 0 : index
    %c0_13 = arith.constant 0 : index
    %31 = vector.load %arg3[%c0_12, %c0_13] : memref<2x256xf32, #tpu.memory_space<vmem>>, vector<2x256xf32>
    tpu.vector_store %arg3[%c0_12, %c0_13], %30 {strides = array<i32>} : memref<2x256xf32, #tpu.memory_space<vmem>>, vector<2x256xf32>,
    return
  }
  func.func @transform_0(%arg0: i32) -> (i32, i32, i32) {
    %c0_i32 = arith.constant 0 : i32
    %c0_i32_0 = arith.constant 0 : i32
    %c0_i32_1 = arith.constant 0 : i32
    return %c0_i32, %c0_i32_0, %arg0 : i32, i32, i32
  }
  func.func @transform_1(%arg0: i32) -> (i32, i32) {
    %c0_i32 = arith.constant 0 : i32
    %c0_i32_0 = arith.constant 0 : i32
    return %c0_i32, %arg0 : i32, i32
  }
  func.func @transform_2(%arg0: i32) -> (i32, i32) {
    %c0_i32 = arith.constant 0 : i32
    %c0_i32_0 = arith.constant 0 : i32
    return %c0_i32, %arg0 : i32, i32
  }
}

</mosaic_0001>

<llo_original>
// kernel: tpu_custom_call.1
$region0: #{tpu_custom_call.1}
  #allocation0 [shape = 'u32[]', space=smem, size = 0x4, offset = 0x4, fixed_abs, tag = 'smem constant byte address 0x4 - core index']
  #allocation1 [shape = 'u32[144,128]{1,0:T(1,128)}', space=vmem, size = 0x12000, scoped, tag = 'internal scratch']
  %s0 = inlined_call_operand.hbm [shape: f32[2,4,256], index: 0, kind: input, shape index: {}]
  %s1 = inlined_call_operand.hbm [shape: s32[2,256], index: 1, kind: input, shape index: {}]
  %s2 = inlined_call_operand.hbm [shape: f32[2,256], index: 2, kind: output, shape index: {}]
  %s3 = sld [smem:[#allocation0]]
  $region26: #{tpu_custom_call.1} parent=0
    _
  %s5 = ssub.s32 1, %s3
  %s6 = scalar_select 0, %s5, %s3
  $region1: #{tpu_custom_call.1} parent=0
    #allocation2 [shape = 'u8[8192]{0}', space=vmem, size = 0x2000, scoped, tag = 'input window, operand 0, single buffered']
    #allocation3 [shape = 's32[1]{0}', space=sflag, size = 0x4, scoped, tag = 'scoped memory for tpu_custom_call.1']
    #allocation4 [shape = 's32[1]{0}', space=sflag, size = 0x4, scoped, tag = 'scoped memory for tpu_custom_call.1']
    #allocation5 [shape = 'u8[2048]{0}', space=vmem, size = 0x800, scoped, tag = 'input window, operand 1, single buffered']
    #allocation6 [shape = 's32[1]{0}', space=sflag, size = 0x4, scoped, tag = 'scoped memory for tpu_custom_call.1']
    #allocation7 [shape = 'u8[2048]{0}', space=vmem, size = 0x800, scoped, tag = 'output window, operand 0, single buffered']
    %7 = vsyncpa [#allocation3], 0
    %8 = vsyncpa [#allocation6], 0
    %9 = vsyncpa [#allocation4], 0
    // Predicated region
    $region2: #{tpu_custom_call.1} parent=1 // pred_check
      _
    $region3: #{tpu_custom_call.1} parent=1 // pred_check_branch
      %11 = sbr.rel (0) target = $region5
    $region4: #{tpu_custom_call.1} parent=1 // pred_region
      %s13 = ssub.s32 256, 256
      %14 = vsyncadd [#allocation3], %s13
      %s15 = sshll.u32 [#allocation2], 4
      %s16 = int_to_ptr.vmem [resolvable:$true] %s15
      %21 = dma.hbm_to_vmem [thread:$0]  %s0, 256, %s16, [#allocation3], 128, 128, 8
    $region5: #{tpu_custom_call.1} parent=1 // pred_fallthru
      _
    // Predicated region
    $region6: #{tpu_custom_call.1} parent=1 // pred_check
      _
    $region7: #{tpu_custom_call.1} parent=1 // pred_check_branch
      %23 = sbr.rel (0) target = $region9
    $region8: #{tpu_custom_call.1} parent=1 // pred_region
      %s25 = ssub.s32 64, 64
      %26 = vsyncadd [#allocation6], %s25
      %s28 = sshll.u32 [#allocation5], 4
      %s29 = int_to_ptr.vmem [resolvable:$true] %s28
      %31 = dma.hbm_to_vmem [thread:$0]  %s1, 64, %s29, [#allocation6]
    $region9: #{tpu_custom_call.1} parent=1 // pred_fallthru
      _
    // Predicated region
    $region10: #{tpu_custom_call.1} parent=1 // pred_check
      _
    $region11: #{tpu_custom_call.1} parent=1 // pred_check_branch
      %33 = sbr.rel (0) target = $region13
    $region12: #{tpu_custom_call.1} parent=1 // pred_region
      %34 = dma.done [#allocation3], 256
    $region13: #{tpu_custom_call.1} parent=1 // pred_fallthru
      _
    // Predicated region
    $region14: #{tpu_custom_call.1} parent=1 // pred_check
      _
    $region15: #{tpu_custom_call.1} parent=1 // pred_check_branch
      %36 = sbr.rel (0) target = $region17
    $region16: #{tpu_custom_call.1} parent=1 // pred_region
      %37 = dma.done [#allocation6], 64
    $region17: #{tpu_custom_call.1} parent=1 // pred_fallthru
      _
    %v38 = vld [vmem:[#allocation2] sm:$0xff]
    %v39 = vld [vmem:[#allocation2 + $0x8] sm:$0xff]
    %v40 = vld [vmem:[#allocation5] sm:$0xf]
    %v43 = vcombine.high %v38, %v38
    %v44 = vcombine.high %v39, %v39
    %vm47 = vcmask 1043456
    %v48 = vsel %vm47, %v38, -inf
    %v49 = vrot.slane %v48, 4
    %v50 = vmax.f32 %v48, %v49
    %v51 = vrot.slane %v50, 2
    %v52 = vmax.f32 %v50, %v51
    %v53 = vrot.slane %v52, 1
    %v54 = vmax.f32 %v52, %v53
    %v55 = vsel %vm47, %v43, -inf
    %v56 = vrot.slane %v55, 4
    %v57 = vmax.f32 %v55, %v56
    %v58 = vrot.slane %v57, 2
    %v59 = vmax.f32 %v57, %v58
    %v60 = vrot.slane %v59, 1
    %v61 = vmax.f32 %v59, %v60
    %v62 = vsel %vm47, %v39, -inf
    %v63 = vrot.slane %v62, 4
    %v64 = vmax.f32 %v62, %v63
    %v65 = vrot.slane %v64, 2
    %v66 = vmax.f32 %v64, %v65
    %v67 = vrot.slane %v66, 1
    %v68 = vmax.f32 %v66, %v67
    %v69 = vsel %vm47, %v44, -inf
    %v70 = vrot.slane %v69, 4
    %v71 = vmax.f32 %v69, %v70
    %v72 = vrot.slane %v71, 2
    %v73 = vmax.f32 %v71, %v72
    %v74 = vrot.slane %v73, 1
    %v75 = vmax.f32 %v73, %v74
    %v80 = vcombine.low %v54, %v61
    %v81 = vcombine.low %v68, %v75
    %v84 = vsub.f32 %v38, %v80
    %v85 = vsub.f32 %v39, %v81
    %v86 = vmul.f32 %v84, 1.442695
    %v87 = vpow.pop %v86
    %v88 = vmul.f32 %v85, 1.442695
    %v89 = vpow.pop %v88
    %v92 = vcombine.high %v87, %v87
    %v93 = vcombine.high %v89, %v89
    %v96 = vsel %vm47, %v87, 0.0
    %v97 = vrot.slane %v96, 4
    %v98 = vadd.f32 %v96, %v97
    %v99 = vrot.slane %v98, 2
    %v100 = vadd.f32 %v98, %v99
    %v101 = vrot.slane %v100, 1
    %v102 = vadd.f32 %v100, %v101
    %v103 = vsel %vm47, %v92, 0.0
    %v104 = vrot.slane %v103, 4
    %v105 = vadd.f32 %v103, %v104
    %v106 = vrot.slane %v105, 2
    %v107 = vadd.f32 %v105, %v106
    %v108 = vrot.slane %v107, 1
    %v109 = vadd.f32 %v107, %v108
    %v110 = vsel %vm47, %v89, 0.0
    %v111 = vrot.slane %v110, 4
    %v112 = vadd.f32 %v110, %v111
    %v113 = vrot.slane %v112, 2
    %v114 = vadd.f32 %v112, %v113
    %v115 = vrot.slane %v114, 1
    %v116 = vadd.f32 %v114, %v115
    %v117 = vsel %vm47, %v93, 0.0
    %v118 = vrot.slane %v117, 4
    %v119 = vadd.f32 %v117, %v118
    %v120 = vrot.slane %v119, 2
    %v121 = vadd.f32 %v119, %v120
    %v122 = vrot.slane %v121, 1
    %v123 = vadd.f32 %v121, %v122
    %v128 = vcombine.low %v102, %v109
    %v129 = vcombine.low %v116, %v123
    %v132 = vrcp.pop %v128
    %v133 = vmul.f32 %v87, %v132
    %v134 = vrcp.pop %v129
    %v135 = vmul.f32 %v89, %v134
    %v136 = vadd.f32 %v133, 1e-06
    %v137 = vadd.f32 %v135, 1e-06
    %v138 = vlog2.pop %v136
    %v139 = vmul.f32 %v138, 0.6931472
    %v140 = vlog2.pop %v137
    %v141 = vmul.f32 %v140, 0.6931472
    %v142 = vsub.f32 1.0, %v136
    %v143 = vsub.f32 1.0, %v137
    %v144 = vmul.f32 %v142, %v142
    %v145 = vmul.f32 %v143, %v143
    %v146 = vmul.f32 %v144, -0.5
    %v147 = vmul.f32 %v145, -0.5
    %v148 = vmul.f32 %v146, %v139
    %v149 = vmul.f32 %v147, %v141
    %v150 = vlaneseq
    %v151 = vshrl.u32 %v150, 7
    %v153 = vunpack.c.l.s4 1966171168
    %v154 = vunpack.c.0.s8 %v153
    %v155 = vlaneseq
    %v156 = vshrl.u32 %v155, 7
    %v157 = vsub.s32 %v154, %v156
    %v158 = vrot.slane %v40, %v157
    %v159 = vcombine.high %v158, %v158
    %v160 = vlaneseq
    %v161 = vshrl.u32 %v160, 7
    %v162 = vsub.s32 0, %v161
    %v163 = vrot.slane %v158, %v162
    %v164 = vlaneseq
    %v165 = vshrl.u32 %v164, 7
    %v166 = vsub.s32 1, %v165
    %v167 = vrot.slane %v158, %v166
    %v168 = vlaneseq
    %v169 = vshrl.u32 %v168, 7
    %v170 = vsub.s32 0, %v169
    %v171 = vrot.slane %v159, %v170
    %v172 = vlaneseq
    %v173 = vshrl.u32 %v172, 7
    %v174 = vsub.s32 1, %v173
    %v175 = vrot.slane %v159, %v174
    %vm176 = vcmp.eq.s32.totalorder %v151, %v163
    %vm177 = vcmp.eq.s32.totalorder %v151, %v167
    %vm178 = vcmp.eq.s32.totalorder %v151, %v171
    %vm179 = vcmp.eq.s32.totalorder %v151, %v175
    %v180 = vsel %vm176, 1.0, 0.0
    %v181 = vsel %vm177, 1.0, 0.0
    %v182 = vsel %vm178, 1.0, 0.0
    %v183 = vsel %vm179, 1.0, 0.0
    %v184 = vadd.f32 %v180, 1e-06
    %v185 = vadd.f32 %v181, 1e-06
    %v186 = vadd.f32 %v182, 1e-06
    %v187 = vadd.f32 %v183, 1e-06
    %v190 = vcombine.high %v148, %v148
    %v191 = vcombine.high %v149, %v149
    %v194 = vmul.f32 %v184, %v148
    %v195 = vmul.f32 %v185, %v190
    %v196 = vmul.f32 %v186, %v149
    %v197 = vmul.f32 %v187, %v191
    %v198 = vsel %vm47, %v194, 0.0
    %v199 = vrot.slane %v198, 4
    %v200 = vadd.f32 %v198, %v199
    %v201 = vrot.slane %v200, 2
    %v202 = vadd.f32 %v200, %v201
    %v203 = vrot.slane %v202, 1
    %v204 = vadd.f32 %v202, %v203
    %v205 = vsel %vm47, %v195, 0.0
    %v206 = vrot.slane %v205, 4
    %v207 = vadd.f32 %v205, %v206
    %v208 = vrot.slane %v207, 2
    %v209 = vadd.f32 %v207, %v208
    %v210 = vrot.slane %v209, 1
    %v211 = vadd.f32 %v209, %v210
    %v212 = vsel %vm47, %v196, 0.0
    %v213 = vrot.slane %v212, 4
    %v214 = vadd.f32 %v212, %v213
    %v215 = vrot.slane %v214, 2
    %v216 = vadd.f32 %v214, %v215
    %v217 = vrot.slane %v216, 1
    %v218 = vadd.f32 %v216, %v217
    %v219 = vsel %vm47, %v197, 0.0
    %v220 = vrot.slane %v219, 4
    %v221 = vadd.f32 %v219, %v220
    %v222 = vrot.slane %v221, 2
    %v223 = vadd.f32 %v221, %v222
    %v224 = vrot.slane %v223, 1
    %v225 = vadd.f32 %v223, %v224
    %v230 = vcombine.low %v204, %v211
    %v232 = vunpack.c.l.s4 1983009808
    %v233 = vunpack.c.0.s8 %v232
    %v234 = vlaneseq
    %v235 = vshrl.u32 %v234, 7
    %v236 = vsub.s32 %v233, %v235
    %v237 = vrot.slane %v230, %v236
    %v238 = vcombine.low %v218, %v225
    %v240 = vunpack.c.l.s4 1983009808
    %v241 = vunpack.c.0.s8 %v240
    %v242 = vlaneseq
    %v243 = vshrl.u32 %v242, 7
    %v244 = vsub.s32 %v241, %v243
    %v245 = vrot.slane %v238, %v244
    %vm246 = vcmask 1044484
    %v247 = vsel %vm246, %v237, %v237
    %vm248 = vcmask 1046534
    %v249 = vsel %vm248, %v237, %v247
    %v250 = vrot.slane %v245, 7
    %vm251 = vcmask 1041409
    %v252 = vsel %vm251, %v250, %v249
    %vm253 = vcmask 1043459
    %v254 = vsel %vm253, %v250, %v252
    %vm255 = vcmask 1045509
    %v256 = vsel %vm255, %v250, %v254
    %vm257 = vcmask 1047559
    %v258 = vsel %vm257, %v250, %v256
    %260 = vst [vmem:[#allocation7] sm:$0xf] %v258
    // Predicated region
    $region18: #{tpu_custom_call.1} parent=1 // pred_check
      _
    $region19: #{tpu_custom_call.1} parent=1 // pred_check_branch
      %262 = sbr.rel (0) target = $region21
    $region20: #{tpu_custom_call.1} parent=1 // pred_region
      %s264 = ssub.s32 64, 64
      %265 = vsyncadd [#allocation4], %s264
      %s267 = sshll.u32 [#allocation7], 4
      %s268 = int_to_ptr.vmem [resolvable:$true] %s267
      %270 = dma.vmem_to_hbm [thread:$0]  %s268, 64, %s2, [#allocation4]
    $region21: #{tpu_custom_call.1} parent=1 // pred_fallthru
      _
    // Predicated region
    $region22: #{tpu_custom_call.1} parent=1 // pred_check
      _
    $region23: #{tpu_custom_call.1} parent=1 // pred_check_branch
      %272 = sbr.rel (0) target = $region25
    $region24: #{tpu_custom_call.1} parent=1 // pred_region
      %273 = dma.done [#allocation4], 64
    $region25: #{tpu_custom_call.1} parent=1 // pred_fallthru
      _
    %274 = vsyncpa [#allocation3], 1
    %275 = vsyncpa [#allocation6], 1
    %276 = vsyncpa [#allocation4], 1

</llo_original>
